<compile_context>
chip_gen: v7x
topology: tpu7x:2x2x1
jax: 0.10.0
libtpu: 0.0.40
codegen_flags: <defaults>
</compile_context>

<pallas_src>
import jax
import jax.numpy as jnp
import numpy as np
from jax.experimental import pallas as pl
from jax.experimental.pallas import tpu as pltpu


def _related_kernel(a_ref, b_ref, out_ref, acc_ref):
    # a_ref:   (S1, F)  signal-1 block of the current batch (seq x feature)
    # b_ref:   (S2, F)  signal-2 block of the current batch
    # out_ref: (1, F)   per-(batch, feature) partial  relate.sum()/relate.max()
    # acc_ref: (K, F)   f32 VMEM scratch holding the full-conv taps
    a = a_ref[...].astype(jnp.float32)          # per-tile cast, (S1, F)
    b = b_ref[...].astype(jnp.float32)          # (S2, F)
    s1 = a.shape[0]
    s2 = b.shape[0]

    # Zero the scratch every grid step (scratch persists across iterations).
    acc_ref[...] = jnp.zeros_like(acc_ref)

    # Shift-and-accumulate full convolution: O(S1) full-lane FMAs.
    #   acc[j + t, f] += a[j, f] * b[t, f]   for t in [0, S2)
    for j in range(s1):                          # static slices, O(S1) unroll
        acc_ref[j:j + s2, :] = acc_ref[j:j + s2, :] + a[j:j + 1, :] * b

    conv_max = jnp.max(acc_ref[...], axis=0, keepdims=True)            # (1, F)
    conv_sum = (jnp.sum(a, axis=0, keepdims=True)
                * jnp.sum(b, axis=0, keepdims=True))                    # (1, F)
    out_ref[...] = conv_sum / conv_max


@jax.jit
def related(array1, array2):
    """JAX/Pallas equivalent of Related.forward(array1, array2) -> scalar."""
    B, S1, F = array1.shape
    B2, S2, F2 = array2.shape
    assert B == B2 and F == F2, "batch / feature dims must match"
    K = S1 + S2 - 1  # full-convolution length

    partials = pl.pallas_call(
        _related_kernel,
        out_shape=jax.ShapeDtypeStruct((B, 1, F), jnp.float32),
        grid=(B,),
        in_specs=[
            pl.BlockSpec((None, S1, F), lambda i: (i, 0, 0)),
            pl.BlockSpec((None, S2, F), lambda i: (i, 0, 0)),
        ],
        out_specs=pl.BlockSpec((None, 1, F), lambda i: (i, 0, 0)),
        scratch_shapes=[pltpu.VMEM((K, F), jnp.float32)],
        compiler_params=pltpu.CompilerParams(
            dimension_semantics=("parallel",)),
    )(array1, array2)
    return jnp.sum(partials)


def _reference_loss(a_np, b_np):
    """numpy reference mirroring the PyTorch/scipy module."""
    loss = 0.0
    for i in range(a_np.shape[0]):
        for f in range(a_np.shape[2]):
            r = np.convolve(a_np[i, :, f].astype(np.float64),
                            b_np[i, :, f].astype(np.float64), mode="full")
            loss += r.sum() / r.max()
    return loss


if __name__ == "__main__":
    key = jax.random.PRNGKey(0)
    k1, k2 = jax.random.split(key)

    B, S, F = 2, 8, 4  # batch, sequence length, features
    # positive values keep relate.max() well away from zero (stable division);
    # semantics are identical to the PyTorch module.
    array1 = jax.random.uniform(k1, (B, S, F), jnp.float32, 0.5, 1.5)
    array2 = jax.random.uniform(k2, (B, S, F), jnp.float32, 0.5, 1.5)

    loss = related(array1, array2)
    jax.block_until_ready(loss)

    ref = _reference_loss(np.asarray(array1), np.asarray(array2))
    np.testing.assert_allclose(np.asarray(loss), ref, rtol=1e-5, atol=1e-5)

    print("KERNEL_OK")
</pallas_src>

<mosaic_0001>
module attributes {stable_mosaic.version = 11 : i64} {
  func.func @_related_kernel(%arg0: i32, %arg1: memref<1x8x4xf32, #tpu.memory_space<vmem>>, %arg2: memref<1x8x4xf32, #tpu.memory_space<vmem>>, %arg3: memref<1x1x4xf32, #tpu.memory_space<vmem>>, %arg4: memref<15x4xf32, #tpu.memory_space<vmem>>) attributes {dimension_semantics = [#tpu.dimension_semantics<parallel>], iteration_bounds = array<i64: 2>, scalar_prefetch = 0 : i64, scratch_operands = 1 : i64, tpu.core_type = #tpu.core_type<tc>, window_params = [{transform_indices = @transform_0, window_bounds = array<i64: 1, 8, 4>}, {transform_indices = @transform_1, window_bounds = array<i64: 1, 8, 4>}, {transform_indices = @transform_2, window_bounds = array<i64: 1, 1, 4>}]} {
    %c0 = arith.constant 0 : index
    %c0_0 = arith.constant 0 : index
    %c0_1 = arith.constant 0 : index
    %0 = vector.load %arg1[%c0, %c0_0, %c0_1] : memref<1x8x4xf32, #tpu.memory_space<vmem>>, vector<1x8x4xf32>
    %1 = vector.shape_cast %0 : vector<1x8x4xf32> to vector<8x4xf32>
    %c0_2 = arith.constant 0 : index
    %c0_3 = arith.constant 0 : index
    %c0_4 = arith.constant 0 : index
    %2 = vector.load %arg2[%c0_2, %c0_3, %c0_4] : memref<1x8x4xf32, #tpu.memory_space<vmem>>, vector<1x8x4xf32>
    %3 = vector.shape_cast %2 : vector<1x8x4xf32> to vector<8x4xf32>
    %cst = arith.constant 0.000000e+00 : f32
    %4 = vector.broadcast %cst : f32 to vector<15x4xf32>
    %c0_5 = arith.constant 0 : index
    %c0_6 = arith.constant 0 : index
    %5 = vector.load %arg4[%c0_5, %c0_6] : memref<15x4xf32, #tpu.memory_space<vmem>>, vector<15x4xf32>
    tpu.vector_store %arg4[%c0_5, %c0_6], %4 {strides = array<i32>} : memref<15x4xf32, #tpu.memory_space<vmem>>, vector<15x4xf32>,
    %c0_7 = arith.constant 0 : index
    %c0_8 = arith.constant 0 : index
    %6 = vector.load %arg4[%c0_7, %c0_8] : memref<15x4xf32, #tpu.memory_space<vmem>>, vector<8x4xf32>
    %7 = vector.extract_strided_slice %1 {offsets = [0, 0], sizes = [1, 4], strides = [1, 1]} : vector<8x4xf32> to vector<1x4xf32>
    %8 = vector.broadcast %7 : vector<1x4xf32> to vector<8x4xf32>
    %9 = arith.mulf %8, %3 : vector<8x4xf32>
    %10 = arith.addf %6, %9 : vector<8x4xf32>
    %c0_9 = arith.constant 0 : index
    %c0_10 = arith.constant 0 : index
    %11 = vector.load %arg4[%c0_9, %c0_10] : memref<15x4xf32, #tpu.memory_space<vmem>>, vector<8x4xf32>
    tpu.vector_store %arg4[%c0_9, %c0_10], %10 {strides = array<i32>} : memref<15x4xf32, #tpu.memory_space<vmem>>, vector<8x4xf32>,
    %c1 = arith.constant 1 : index
    %c0_11 = arith.constant 0 : index
    %12 = vector.load %arg4[%c1, %c0_11] : memref<15x4xf32, #tpu.memory_space<vmem>>, vector<8x4xf32>
    %13 = vector.extract_strided_slice %1 {offsets = [1, 0], sizes = [1, 4], strides = [1, 1]} : vector<8x4xf32> to vector<1x4xf32>
    %14 = vector.broadcast %13 : vector<1x4xf32> to vector<8x4xf32>
    %15 = arith.mulf %14, %3 : vector<8x4xf32>
    %16 = arith.addf %12, %15 : vector<8x4xf32>
    %c1_12 = arith.constant 1 : index
    %c0_13 = arith.constant 0 : index
    %17 = vector.load %arg4[%c1_12, %c0_13] : memref<15x4xf32, #tpu.memory_space<vmem>>, vector<8x4xf32>
    tpu.vector_store %arg4[%c1_12, %c0_13], %16 {strides = array<i32>} : memref<15x4xf32, #tpu.memory_space<vmem>>, vector<8x4xf32>,
    %c2 = arith.constant 2 : index
    %c0_14 = arith.constant 0 : index
    %18 = vector.load %arg4[%c2, %c0_14] : memref<15x4xf32, #tpu.memory_space<vmem>>, vector<8x4xf32>
    %19 = vector.extract_strided_slice %1 {offsets = [2, 0], sizes = [1, 4], strides = [1, 1]} : vector<8x4xf32> to vector<1x4xf32>
    %20 = vector.broadcast %19 : vector<1x4xf32> to vector<8x4xf32>
    %21 = arith.mulf %20, %3 : vector<8x4xf32>
    %22 = arith.addf %18, %21 : vector<8x4xf32>
    %c2_15 = arith.constant 2 : index
    %c0_16 = arith.constant 0 : index
    %23 = vector.load %arg4[%c2_15, %c0_16] : memref<15x4xf32, #tpu.memory_space<vmem>>, vector<8x4xf32>
    tpu.vector_store %arg4[%c2_15, %c0_16], %22 {strides = array<i32>} : memref<15x4xf32, #tpu.memory_space<vmem>>, vector<8x4xf32>,
    %c3 = arith.constant 3 : index
    %c0_17 = arith.constant 0 : index
    %24 = vector.load %arg4[%c3, %c0_17] : memref<15x4xf32, #tpu.memory_space<vmem>>, vector<8x4xf32>
    %25 = vector.extract_strided_slice %1 {offsets = [3, 0], sizes = [1, 4], strides = [1, 1]} : vector<8x4xf32> to vector<1x4xf32>
    %26 = vector.broadcast %25 : vector<1x4xf32> to vector<8x4xf32>
    %27 = arith.mulf %26, %3 : vector<8x4xf32>
    %28 = arith.addf %24, %27 : vector<8x4xf32>
    %c3_18 = arith.constant 3 : index
    %c0_19 = arith.constant 0 : index
    %29 = vector.load %arg4[%c3_18, %c0_19] : memref<15x4xf32, #tpu.memory_space<vmem>>, vector<8x4xf32>
    tpu.vector_store %arg4[%c3_18, %c0_19], %28 {strides = array<i32>} : memref<15x4xf32, #tpu.memory_space<vmem>>, vector<8x4xf32>,
    %c4 = arith.constant 4 : index
    %c0_20 = arith.constant 0 : index
    %30 = vector.load %arg4[%c4, %c0_20] : memref<15x4xf32, #tpu.memory_space<vmem>>, vector<8x4xf32>
    %31 = vector.extract_strided_slice %1 {offsets = [4, 0], sizes = [1, 4], strides = [1, 1]} : vector<8x4xf32> to vector<1x4xf32>
    %32 = vector.broadcast %31 : vector<1x4xf32> to vector<8x4xf32>
    %33 = arith.mulf %32, %3 : vector<8x4xf32>
    %34 = arith.addf %30, %33 : vector<8x4xf32>
    %c4_21 = arith.constant 4 : index
    %c0_22 = arith.constant 0 : index
    %35 = vector.load %arg4[%c4_21, %c0_22] : memref<15x4xf32, #tpu.memory_space<vmem>>, vector<8x4xf32>
    tpu.vector_store %arg4[%c4_21, %c0_22], %34 {strides = array<i32>} : memref<15x4xf32, #tpu.memory_space<vmem>>, vector<8x4xf32>,
    %c5 = arith.constant 5 : index
    %c0_23 = arith.constant 0 : index
    %36 = vector.load %arg4[%c5, %c0_23] : memref<15x4xf32, #tpu.memory_space<vmem>>, vector<8x4xf32>
    %37 = vector.extract_strided_slice %1 {offsets = [5, 0], sizes = [1, 4], strides = [1, 1]} : vector<8x4xf32> to vector<1x4xf32>
    %38 = vector.broadcast %37 : vector<1x4xf32> to vector<8x4xf32>
    %39 = arith.mulf %38, %3 : vector<8x4xf32>
    %40 = arith.addf %36, %39 : vector<8x4xf32>
    %c5_24 = arith.constant 5 : index
    %c0_25 = arith.constant 0 : index
    %41 = vector.load %arg4[%c5_24, %c0_25] : memref<15x4xf32, #tpu.memory_space<vmem>>, vector<8x4xf32>
    tpu.vector_store %arg4[%c5_24, %c0_25], %40 {strides = array<i32>} : memref<15x4xf32, #tpu.memory_space<vmem>>, vector<8x4xf32>,
    %c6 = arith.constant 6 : index
    %c0_26 = arith.constant 0 : index
    %42 = vector.load %arg4[%c6, %c0_26] : memref<15x4xf32, #tpu.memory_space<vmem>>, vector<8x4xf32>
    %43 = vector.extract_strided_slice %1 {offsets = [6, 0], sizes = [1, 4], strides = [1, 1]} : vector<8x4xf32> to vector<1x4xf32>
    %44 = vector.broadcast %43 : vector<1x4xf32> to vector<8x4xf32>
    %45 = arith.mulf %44, %3 : vector<8x4xf32>
    %46 = arith.addf %42, %45 : vector<8x4xf32>
    %c6_27 = arith.constant 6 : index
    %c0_28 = arith.constant 0 : index
    %47 = vector.load %arg4[%c6_27, %c0_28] : memref<15x4xf32, #tpu.memory_space<vmem>>, vector<8x4xf32>
    tpu.vector_store %arg4[%c6_27, %c0_28], %46 {strides = array<i32>} : memref<15x4xf32, #tpu.memory_space<vmem>>, vector<8x4xf32>,
    %c7 = arith.constant 7 : index
    %c0_29 = arith.constant 0 : index
    %48 = vector.load %arg4[%c7, %c0_29] : memref<15x4xf32, #tpu.memory_space<vmem>>, vector<8x4xf32>
    %49 = vector.extract_strided_slice %1 {offsets = [7, 0], sizes = [1, 4], strides = [1, 1]} : vector<8x4xf32> to vector<1x4xf32>
    %50 = vector.broadcast %49 : vector<1x4xf32> to vector<8x4xf32>
    %51 = arith.mulf %50, %3 : vector<8x4xf32>
    %52 = arith.addf %48, %51 : vector<8x4xf32>
    %c7_30 = arith.constant 7 : index
    %c0_31 = arith.constant 0 : index
    %53 = vector.load %arg4[%c7_30, %c0_31] : memref<15x4xf32, #tpu.memory_space<vmem>>, vector<8x4xf32>
    tpu.vector_store %arg4[%c7_30, %c0_31], %52 {strides = array<i32>} : memref<15x4xf32, #tpu.memory_space<vmem>>, vector<8x4xf32>,
    %c0_32 = arith.constant 0 : index
    %c0_33 = arith.constant 0 : index
    %54 = vector.load %arg4[%c0_32, %c0_33] : memref<15x4xf32, #tpu.memory_space<vmem>>, vector<15x4xf32>
    %cst_34 = arith.constant dense<0xFF800000> : vector<4xf32>
    %55 = vector.multi_reduction <maximumf>, %54, %cst_34 [0] : vector<15x4xf32> to vector<4xf32>
    %56 = vector.shape_cast %55 : vector<4xf32> to vector<1x4xf32>
    %cst_35 = arith.constant dense<0.000000e+00> : vector<4xf32>
    %57 = vector.multi_reduction <add>, %1, %cst_35 [0] : vector<8x4xf32> to vector<4xf32>
    %58 = vector.shape_cast %57 : vector<4xf32> to vector<1x4xf32>
    %cst_36 = arith.constant dense<0.000000e+00> : vector<4xf32>
    %59 = vector.multi_reduction <add>, %3, %cst_36 [0] : vector<8x4xf32> to vector<4xf32>
    %60 = vector.shape_cast %59 : vector<4xf32> to vector<1x4xf32>
    %61 = arith.mulf %58, %60 : vector<1x4xf32>
    %62 = arith.divf %61, %56 : vector<1x4xf32>
    %c0_37 = arith.constant 0 : index
    %c0_38 = arith.constant 0 : index
    %c0_39 = arith.constant 0 : index
    %63 = vector.load %arg3[%c0_37, %c0_38, %c0_39] : memref<1x1x4xf32, #tpu.memory_space<vmem>>, vector<1x1x4xf32>
    %64 = vector.shape_cast %63 : vector<1x1x4xf32> to vector<1x4xf32>
    %65 = vector.shape_cast %62 : vector<1x4xf32> to vector<1x1x4xf32>
    tpu.vector_store %arg3[%c0_37, %c0_38, %c0_39], %65 {strides = array<i32>} : memref<1x1x4xf32, #tpu.memory_space<vmem>>, vector<1x1x4xf32>,
    return
  }
  func.func @transform_0(%arg0: i32) -> (i32, i32, i32) {
    %c0_i32 = arith.constant 0 : i32
    %c0_i32_0 = arith.constant 0 : i32
    %c0_i32_1 = arith.constant 0 : i32
    return %arg0, %c0_i32, %c0_i32_0 : i32, i32, i32
  }
  func.func @transform_1(%arg0: i32) -> (i32, i32, i32) {
    %c0_i32 = arith.constant 0 : i32
    %c0_i32_0 = arith.constant 0 : i32
    %c0_i32_1 = arith.constant 0 : i32
    return %arg0, %c0_i32, %c0_i32_0 : i32, i32, i32
  }
  func.func @transform_2(%arg0: i32) -> (i32, i32, i32) {
    %c0_i32 = arith.constant 0 : i32
    %c0_i32_0 = arith.constant 0 : i32
    %c0_i32_1 = arith.constant 0 : i32
    return %arg0, %c0_i32, %c0_i32_0 : i32, i32, i32
  }
}

</mosaic_0001>

<llo_original>
// kernel: related.1
$region0: #{related.1}
  #allocation0 [shape = 'u32[]', space=smem, size = 0x4, offset = 0x4, fixed_abs, tag = 'smem constant byte address 0x4 - core index']
  #allocation1 [shape = 'u32[144,128]{1,0:T(1,128)}', space=vmem, size = 0x12000, scoped, tag = 'internal scratch']
  #allocation2 [shape = 'f32[15,4]{1,0:T(8,128)}', space=vmem, size = 0x2000, scoped, tag = 'scratch operand']
  %s0 = inlined_call_operand.vmem [shape: f32[2,8,4], index: 0, kind: input, shape index: {}]
  %s1 = inlined_call_operand.vmem [shape: f32[2,8,4], index: 1, kind: input, shape index: {}]
  %s2 = inlined_call_operand.vmem [shape: f32[2,1,4], index: 2, kind: output, shape index: {}]
  %s3 = sld [smem:[#allocation0]]
  $region41: #{related.1} parent=0
    _
  %s5 = ssub.s32 1, %s3
  %s6 = scalar_select 0, %s5, %s3
  loop: start=0, step=1, limit=4
  $region2: #{related.1} parent=0 // loop_pre_header
    _
  $region3: #{related.1} parent=0 // loop_header
    %s8 = sphi 0, %s12
    %p9 = scmp.ge.s32.totalorder %s8, 4
    %s18 = sphi 0, %s20
    %s21 = sphi 0, %s18
    %s22 = sphi 0, %s21
    %s38 = sphi 0, %s22
    %s44 = sphi 0, %s46
    %s47 = sphi 0, %s44
    %s48 = sphi 0, %s47
    %s64 = sphi 0, %s48
    %s70 = sphi 0, %s72
    %s73 = sphi 0, %s70
    %s74 = sphi 0, %s73
    %s90 = sphi 0, %s74
  $region4: #{related.1} parent=0 // loop_header_branch
    %11 = sbr.rel (%p9) target = $region8
  $region5: #{related.1} parent=0 // loop_body
    %s13 = ssub.s32 %s8, 1
    %s14 = ssub.s32 %s8, 2
    %s15 = sadd.s32 %s8, 1
    %s16 = ssub.s32 %s8, %s15
    %p17 = scmp.eq.s32.totalorder %s16, 0
    %s19 = sadd.s32 %s18, 1
    %s20 = scalar_select %p17, %s18, %s19
    %p23 = pneg %p17
    %p24 = scmp.eq.s32.totalorder %s8, 1
    %p25 = por %p23, %p24
    %p26 = scmp.ne.s32.totalorder %s18, %s21
    %p27 = scmp.eq.s32.totalorder %s8, 0
    %p28 = por %p26, %p27
    %p29 = scmp.ne.s32.totalorder %s18, %s21
    %p30 = scmp.eq.s32.totalorder %s13, 1
    %p31 = por %p29, %p30
    %p32 = scmp.ne.s32.totalorder %s21, %s22
    %p33 = scmp.eq.s32.totalorder %s13, 0
    %p34 = por %p32, %p33
    %p35 = scmp.ne.s32.totalorder %s21, %s22
    %p36 = scmp.eq.s32.totalorder %s14, 1
    %p37 = por %p35, %p36
    %p39 = scmp.ne.s32.totalorder %s22, %s38
    %p40 = scmp.eq.s32.totalorder %s14, 0
    %p41 = por %p39, %p40
    %s42 = ssub.s32 %s8, %s15
    %p43 = scmp.eq.s32.totalorder %s42, 0
    %s45 = sadd.s32 %s44, 1
    %s46 = scalar_select %p43, %s44, %s45
    %p49 = pneg %p43
    %p50 = scmp.eq.s32.totalorder %s8, 1
    %p51 = por %p49, %p50
    %p52 = scmp.ne.s32.totalorder %s44, %s47
    %p53 = scmp.eq.s32.totalorder %s8, 0
    %p54 = por %p52, %p53
    %p55 = scmp.ne.s32.totalorder %s44, %s47
    %p56 = scmp.eq.s32.totalorder %s13, 1
    %p57 = por %p55, %p56
    %p58 = scmp.ne.s32.totalorder %s47, %s48
    %p59 = scmp.eq.s32.totalorder %s13, 0
    %p60 = por %p58, %p59
    %p61 = scmp.ne.s32.totalorder %s47, %s48
    %p62 = scmp.eq.s32.totalorder %s14, 1
    %p63 = por %p61, %p62
    %p65 = scmp.ne.s32.totalorder %s48, %s64
    %p66 = scmp.eq.s32.totalorder %s14, 0
    %p67 = por %p65, %p66
    %s68 = ssub.s32 %s8, %s15
    %p69 = scmp.eq.s32.totalorder %s68, 0
    %s71 = sadd.s32 %s70, 1
    %s72 = scalar_select %p69, %s70, %s71
    %p75 = pneg %p69
    %p76 = scmp.eq.s32.totalorder %s8, 1
    %p77 = por %p75, %p76
    %p78 = scmp.ne.s32.totalorder %s70, %s73
    %p79 = scmp.eq.s32.totalorder %s8, 0
    %p80 = por %p78, %p79
    %p81 = scmp.ne.s32.totalorder %s70, %s73
    %p82 = scmp.eq.s32.totalorder %s13, 1
    %p83 = por %p81, %p82
    %p84 = scmp.ne.s32.totalorder %s73, %s74
    %p85 = scmp.eq.s32.totalorder %s13, 0
    %p86 = por %p84, %p85
    %p87 = scmp.ne.s32.totalorder %s73, %s74
    %p88 = scmp.eq.s32.totalorder %s14, 1
    %p89 = por %p87, %p88
    %p91 = scmp.ne.s32.totalorder %s74, %s90
    %p92 = scmp.eq.s32.totalorder %s14, 0
    %p93 = por %p91, %p92
    %p94 = scmp.le.s32.totalorder 1, %s8
    %p95 = scmp.lt.s32.totalorder %s8, 3
    %p96 = pnand %p94, %p95
    %p97 = pneg %p96
    // Predicated region
    $region9: #{related.1} parent=5 // pred_check
      _
    $region10: #{related.1} parent=5 // pred_check_branch
      %99 = sbr.rel (%p96) target = $region12
    $region11: #{related.1} parent=5 // pred_region
      %s100 = ssub.s32 %s8, 1
    $region12: #{related.1} parent=5 // pred_fallthru
      _
    %p101 = scmp.lt.s32.totalorder %s8, 2
    // Predicated region
    $region13: #{related.1} parent=5 // pred_check
      %p102 = pneg %p101
    $region14: #{related.1} parent=5 // pred_check_branch
      %104 = sbr.rel (%p102) target = $region16
    $region15: #{related.1} parent=5 // pred_region
      // Predicated region
      $region17: #{related.1} parent=15 // pred_check
        %p105 = pneg %p28
      $region18: #{related.1} parent=15 // pred_check_branch
        %107 = sbr.rel (%p105) target = $region20
      $region19: #{related.1} parent=15 // pred_region
        %p108 = scmp.lt.s32.totalorder %s8, 1
        %s109 = scalar_select %p108, %s8, 1
        %s110 = smul.addr %s109, 8
        %s111 = scalar_lea.vmem %s0, %s110
      $region20: #{related.1} parent=15 // pred_fallthru
        _
      // Predicated region
      $region21: #{related.1} parent=15 // pred_check
        %p112 = pneg %p54
      $region22: #{related.1} parent=15 // pred_check_branch
        %114 = sbr.rel (%p112) target = $region24
      $region23: #{related.1} parent=15 // pred_region
        %p115 = scmp.lt.s32.totalorder %s8, 1
        %s116 = scalar_select %p115, %s8, 1
        %s117 = smul.addr %s116, 8
        %s118 = scalar_lea.vmem %s1, %s117
      $region24: #{related.1} parent=15 // pred_fallthru
        _
    $region16: #{related.1} parent=5 // pred_fallthru
      _
    %p119 = scmp.le.s32.totalorder 1, %s8
    %p120 = scmp.lt.s32.totalorder %s8, 3
    %p121 = pnand %p119, %p120
    %p122 = pneg %p121
    // Predicated region
    $region25: #{related.1} parent=5 // pred_check
      _
    $region26: #{related.1} parent=5 // pred_check_branch
      %124 = sbr.rel (%p121) target = $region28
    $region27: #{related.1} parent=5 // pred_region
      %s125 = ssub.s32 %s8, 1
      %p126 = scmp.lt.s32.totalorder %s13, 1
      %s127 = scalar_select %p126, %s13, 1
      %s128 = smul.addr %s127, 8
      %s129 = scalar_lea.vmem %s0, %s128
      %p130 = pneg %p34
      %p131 = pneg %p31
      %p132 = scmp.lt.s32.totalorder %s13, 1
      %s133 = scalar_select %p132, %s13, 1
      %s134 = smul.addr %s133, 8
      %s135 = scalar_lea.vmem %s1, %s134
      %p136 = pneg %p60
      %p137 = pneg %p57
      %p138 = pneg %p86
      %p139 = pneg %p83
      %p140 = scmp.lt.s32.totalorder %s13, 1
      %s141 = scalar_select %p140, %s13, 1
      %s142 = scalar_lea.vmem %s2, %s141
      %p143 = scmp.lt.s32.totalorder %s13, 1
      %s144 = scalar_select %p143, %s13, 1
      %s145 = smul.addr %s144, 8
      %s146 = scalar_lea.vmem %s0, %s145
      %p147 = scmp.lt.s32.totalorder %s13, 1
      %s148 = scalar_select %p147, %s13, 1
      %s149 = smul.addr %s148, 8
      %s150 = scalar_lea.vmem %s1, %s149
      %p151 = scmp.lt.s32.totalorder %s13, 1
      %s152 = scalar_select %p151, %s13, 1
      %s153 = scalar_lea.vmem %s2, %s152
      %v154 = vld [vmem:[%s146] sm:$0xff]
      %v155 = vld [vmem:[%s150] sm:$0xff]
      %vm156 = vcmask 31744
      %157 = vst.msk [vmem:[#allocation2] sm:$0xff] %vm156, 0.0
      %vm158 = vcmask 30720
      %159 = vst.msk [vmem:[#allocation2 + $0x8] sm:$0x7f] %vm158, 0.0
      %v160 = vld [vmem:[#allocation2] sm:$0xff]
      %v161 = vlaneseq
      %v162 = vshrl.u32 %v161, 7
      %v163 = vsub.s32 0, %v162
      %v164 = vrot.slane %v154, %v163
      %v165 = vmul.f32 %v164, %v155
      %v166 = vadd.f32 %v160, %v165
      %167 = vst.msk [vmem:[#allocation2] sm:$0xff] %vm156, %v166
      %v168 = vld [vmem:[#allocation2 + $0x1] sm:$0xff]
      %v169 = vlaneseq
      %v170 = vshrl.u32 %v169, 7
      %v171 = vsub.s32 1, %v170
      %v172 = vrot.slane %v154, %v171
      %v173 = vmul.f32 %v172, %v155
      %v174 = vadd.f32 %v168, %v173
      %175 = vst.msk [vmem:[#allocation2 + $0x1] sm:$0xff] %vm156, %v174
      %v176 = vld [vmem:[#allocation2 + $0x2] sm:$0xff]
      %v177 = vlaneseq
      %v178 = vshrl.u32 %v177, 7
      %v179 = vsub.s32 2, %v178
      %v180 = vrot.slane %v154, %v179
      %v181 = vmul.f32 %v180, %v155
      %v182 = vadd.f32 %v176, %v181
      %183 = vst.msk [vmem:[#allocation2 + $0x2] sm:$0xff] %vm156, %v182
      %v184 = vld [vmem:[#allocation2 + $0x3] sm:$0xff]
      %v185 = vlaneseq
      %v186 = vshrl.u32 %v185, 7
      %v187 = vsub.s32 3, %v186
      %v188 = vrot.slane %v154, %v187
      %v189 = vmul.f32 %v188, %v155
      %v190 = vadd.f32 %v184, %v189
      %191 = vst.msk [vmem:[#allocation2 + $0x3] sm:$0xff] %vm156, %v190
      %v192 = vld [vmem:[#allocation2 + $0x4] sm:$0xff]
      %v193 = vlaneseq
      %v194 = vshrl.u32 %v193, 7
      %v195 = vsub.s32 4, %v194
      %v196 = vrot.slane %v154, %v195
      %v197 = vmul.f32 %v196, %v155
      %v198 = vadd.f32 %v192, %v197
      %199 = vst.msk [vmem:[#allocation2 + $0x4] sm:$0xff] %vm156, %v198
      %v200 = vld [vmem:[#allocation2 + $0x5] sm:$0xff]
      %v201 = vlaneseq
      %v202 = vshrl.u32 %v201, 7
      %v203 = vsub.s32 5, %v202
      %v204 = vrot.slane %v154, %v203
      %v205 = vmul.f32 %v204, %v155
      %v206 = vadd.f32 %v200, %v205
      %207 = vst.msk [vmem:[#allocation2 + $0x5] sm:$0xff] %vm156, %v206
      %v208 = vld [vmem:[#allocation2 + $0x6] sm:$0xff]
      %v209 = vlaneseq
      %v210 = vshrl.u32 %v209, 7
      %v211 = vsub.s32 6, %v210
      %v212 = vrot.slane %v154, %v211
      %v213 = vmul.f32 %v212, %v155
      %v214 = vadd.f32 %v208, %v213
      %215 = vst.msk [vmem:[#allocation2 + $0x6] sm:$0xff] %vm156, %v214
      %v216 = vld [vmem:[#allocation2 + $0x7] sm:$0xff]
      %v217 = vlaneseq
      %v218 = vshrl.u32 %v217, 7
      %v219 = vsub.s32 7, %v218
      %v220 = vrot.slane %v154, %v219
      %v221 = vmul.f32 %v220, %v155
      %v222 = vadd.f32 %v216, %v221
      %223 = vst.msk [vmem:[#allocation2 + $0x7] sm:$0xff] %vm156, %v222
      %v224 = vld [vmem:[#allocation2] sm:$0xff]
      %v225 = vld [vmem:[#allocation2 + $0x8] sm:$0x7f]
      %v226 = vsel %vm156, %v224, -inf
      %v227 = vsel %vm158, %v225, -inf
      %v228 = vmax.f32 %v226, %v227
      %v229 = vrot.slane %v228, 4
      %v230 = vmax.f32 %v228, %v229
      %v231 = vrot.slane %v230, 2
      %v232 = vmax.f32 %v230, %v231
      %v233 = vrot.slane %v232, 1
      %v234 = vmax.f32 %v232, %v233
      %v235 = vsel %vm156, %v154, 0.0
      %v236 = vrot.slane %v235, 4
      %v237 = vadd.f32 %v235, %v236
      %v238 = vrot.slane %v237, 2
      %v239 = vadd.f32 %v237, %v238
      %v240 = vrot.slane %v239, 1
      %v241 = vadd.f32 %v239, %v240
      %v242 = vsel %vm156, %v155, 0.0
      %v243 = vrot.slane %v242, 4
      %v244 = vadd.f32 %v242, %v243
      %v245 = vrot.slane %v244, 2
      %v246 = vadd.f32 %v244, %v245
      %v247 = vrot.slane %v246, 1
      %v248 = vadd.f32 %v246, %v247
      %v249 = vmul.f32 %v241, %v248
      %v250 = vrcp.pop %v234
      %v251 = vmul.f32 %v249, %v250
      %vm252 = vcmask 24576
      %253 = vst.msk [vmem:[%s153] sm:$0x1] %vm252, %v251
      %p254 = scmp.lt.s32.totalorder %s13, 1
      %s255 = scalar_select %p254, %s13, 1
      %s256 = scalar_lea.vmem %s2, %s255
      // Predicated region
      $region29: #{related.1} parent=27 // pred_check
        %p257 = pneg %p83
      $region30: #{related.1} parent=27 // pred_check_branch
        %259 = sbr.rel (%p257) target = $region32
      $region31: #{related.1} parent=27 // pred_region
        _
      $region32: #{related.1} parent=27 // pred_fallthru
        _
    $region28: #{related.1} parent=5 // pred_fallthru
      _
    %p260 = scmp.le.s32.totalorder 2, %s8
    // Predicated region
    $region33: #{related.1} parent=5 // pred_check
      %p261 = pneg %p260
    $region34: #{related.1} parent=5 // pred_check_branch
      %263 = sbr.rel (%p261) target = $region36
    $region35: #{related.1} parent=5 // pred_region
      %s264 = ssub.s32 %s8, 2
      // Predicated region
      $region37: #{related.1} parent=35 // pred_check
        %p265 = pneg %p89
      $region38: #{related.1} parent=35 // pred_check_branch
        %267 = sbr.rel (%p265) target = $region40
      $region39: #{related.1} parent=35 // pred_region
        %p268 = scmp.lt.s32.totalorder %s14, 1
        %s269 = scalar_select %p268, %s14, 1
        %s270 = scalar_lea.vmem %s2, %s269
      $region40: #{related.1} parent=35 // pred_fallthru
        _
    $region36: #{related.1} parent=5 // pred_fallthru
      _
  $region6: #{related.1} parent=0 // loop_footer
    %s12 = sadd.s32 1, %s8
  $region7: #{related.1} parent=0 // loop_footer_branch
    %7 = sbr.rel target = $region3
  $region8: #{related.1} parent=0 // loop_exit
    _

</llo_original>
